<compile_context>
chip_gen: v7x
topology: tpu7x:2x2x1
jax: 0.10.0
libtpu: 0.0.40
codegen_flags: <defaults>
</compile_context>

<pallas_src>
import jax
import jax.numpy as jnp
import numpy as np
from jax.experimental import pallas as pl
from jax.experimental.pallas import tpu as pltpu

NUM_STEPS = 15


def _pick_tile(chw_pad, batch, num_steps, out_itemsize,
               budget_bytes=16 * 1024 * 1024):
    """Largest lane tile (multiple of 128) that divides chw_pad, keeps >= 2
    grid steps when possible (v7x megacore), and fits the double-buffered
    input + output blocks plus per-group temporaries in a conservative VMEM
    budget valid on every generation (v5e/v6e 128 MiB, v7x 64 MiB physical)."""
    n = chw_pad // 128
    t_pad = ((num_steps + 7) // 8) * 8  # output block sublane padding (15 -> 16)
    divisors = sorted((d for d in range(1, n + 1) if n % d == 0), reverse=True)
    for d in divisors:
        tile = d * 128
        # Keep at least 2 parallel grid steps so the 2 TensorCores of v7x can
        # each take half the grid (free on single-TC v5e/v6e).
        if chw_pad // tile < 2 and chw_pad > 128:
            continue
        need = (2 * batch * tile * 4                        # input block, double-buffered (f32)
                + 2 * batch * t_pad * tile * out_itemsize   # output block, double-buffered
                + 4 * batch * 8 * tile * 4)                 # per-group elementwise temporaries
        if need <= budget_bytes:
            return tile
    return 128


def _make_kernel(num_steps, chw_pad, tile, batch, out_dtype, use_hw_prng):
    # Static 8-step groups: full-sublane stores; 2 groups for T=15 (8 + 7 rows).
    groups = [(t0, min(8, num_steps - t0)) for t0 in range(0, num_steps, 8)]

    def kernel(seed_ref, x_ref, o_ref):
        # x_ref: (B, tile) probabilities   o_ref: (B, num_steps, tile) spikes
        c = pl.program_id(0)

        # Per-tile prep, done ONCE (not per time step).
        p = jnp.clip(x_ref[...].astype(jnp.float32), 0.0, 1.0)
        # Integer-domain threshold: draw uniform in [0, 2^23), fire iff draw < p*2^23.
        thresh = (p * 8388608.0).astype(jnp.int32)[:, None, :]      # (B, 1, tile)

        if use_hw_prng:
            # Hardware PRNG: ~1 op/vreg of bits; unique stream per (seed, tile).
            pltpu.prng_seed(seed_ref[0], c)
            for t0, g in groups:
                bits = pltpu.prng_random_bits((batch, 8, tile))
                if bits.dtype != jnp.uint32:
                    bits = pltpu.bitcast(bits, jnp.uint32)
                draw = (bits >> 9).astype(jnp.int32)                 # [0, 2^23)
                spikes = (draw < thresh).astype(out_dtype)           # Bernoulli(p)
                o_ref[:, t0:t0 + g, :] = spikes[:, :g, :]
        else:
            # Portable counter-hash fallback (interpret / CPU only): lowbias32
            # on a globally-unique element id; distributionally equivalent
            # Bernoulli(p), not bit-identical to torch/snntorch RNG.
            seed = seed_ref[0].astype(jnp.uint32)
            b_idx = jax.lax.broadcasted_iota(jnp.uint32, (batch, 1, tile), 0)
            l_idx = jax.lax.broadcasted_iota(jnp.uint32, (batch, 1, tile), 2)
            col = l_idx + np.uint32(tile) * c.astype(jnp.uint32)
            base = (b_idx * np.uint32(chw_pad) + col
                    + seed * np.uint32(0x85EBCA6B))                  # (B, 1, tile)
            for t0, g in groups:
                t_iota = jax.lax.broadcasted_iota(jnp.uint32, (1, 8, 1), 1)
                v = base + (t_iota + np.uint32(t0 + 1)) * np.uint32(0x9E3779B9)
                v = v ^ (v >> 16)
                v = v * np.uint32(0x7FEB352D)
                v = v ^ (v >> 15)
                v = v * np.uint32(0x846CA68B)
                v = v ^ (v >> 16)
                draw = (v >> 9).astype(jnp.int32)                    # [0, 2^23)
                spikes = (draw < thresh).astype(out_dtype)
                o_ref[:, t0:t0 + g, :] = spikes[:, :g, :]

    return kernel


def trainable_coding_forward(x, seed=0, num_steps=NUM_STEPS,
                             out_dtype=jnp.float32, use_hw_prng=None):
    """x: [B, C, H, W] float in [0, 1] -> [B, num_steps, C, H, W] spikes.

    out_dtype defaults to float32 to match torch semantics.  Spikes are exactly
    0/1, so passing bfloat16 (or int8) is lossless and halves (quarters) the
    dominant HBM store traffic -- strongly recommended when the consumer allows.
    """
    B, C, H, W = x.shape
    chw = C * H * W
    chw_pad = ((chw + 127) // 128) * 128

    flat = x.reshape(B, chw).astype(jnp.float32)
    if chw_pad != chw:
        flat = jnp.pad(flat, ((0, 0), (0, chw_pad - chw)))

    if use_hw_prng is None:
        # Hardware PRNG only lowers under Mosaic; fall back to the portable
        # hash when running on CPU / interpret mode.
        use_hw_prng = jax.default_backend() == "tpu"

    out_itemsize = np.dtype(out_dtype).itemsize
    tile = _pick_tile(chw_pad, B, num_steps, out_itemsize)
    grid = (chw_pad // tile,)
    # TODO(synk): for CHW == 128 (grid of 1) a second parallel grid axis over B
    # would let v7x use both TensorCores; not needed for typical image sizes.

    seed_arr = jnp.array([seed], dtype=jnp.int32)
    kernel = _make_kernel(num_steps, chw_pad, tile, B, out_dtype, use_hw_prng)

    out = pl.pallas_call(
        kernel,
        out_shape=jax.ShapeDtypeStruct((B, num_steps, chw_pad), out_dtype),
        grid_spec=pltpu.PrefetchScalarGridSpec(
            num_scalar_prefetch=1,
            grid=grid,
            in_specs=[pl.BlockSpec((B, tile), lambda c, seed_ref: (0, c))],
            out_specs=pl.BlockSpec(
                (B, num_steps, tile), lambda c, seed_ref: (0, 0, c)
            ),
        ),
        compiler_params=pltpu.CompilerParams(
            dimension_semantics=("parallel",),
            vmem_limit_bytes=32 * 1024 * 1024,
        ),
    )(seed_arr, flat)

    if chw_pad != chw:
        out = out[:, :, :chw]
    # Output is already (B, T, ...) -- the permute is fused; this reshape is free.
    return out.reshape(B, num_steps, C, H, W)


if __name__ == "__main__":
    key = jax.random.PRNGKey(0)
    # Small image-like input (values in [0, 1) so they are valid spike probabilities).
    x = jax.random.uniform(key, (2, 4, 16, 16), dtype=jnp.float32)

    y = trainable_coding_forward(x, seed=0)
    y = jax.block_until_ready(y)

    assert y.shape == (2, NUM_STEPS, 4, 16, 16), y.shape
    assert y.dtype == jnp.float32
    # spikes must be binary
    assert bool(jnp.all((y == 0.0) | (y == 1.0)))
    # mean spike rate should roughly match mean probability (coarse sanity check)
    assert abs(float(y.mean()) - float(x.mean())) < 0.05

    print("KERNEL_OK")
</pallas_src>

<mosaic_0001>
module attributes {stable_mosaic.version = 11 : i64} {
  func.func @kernel(%arg0: i32, %arg1: memref<1xi32, #tpu.memory_space<smem>>, %arg2: memref<2x512xf32, #tpu.memory_space<vmem>>, %arg3: memref<2x15x512xf32, #tpu.memory_space<vmem>>) attributes {dimension_semantics = [#tpu.dimension_semantics<parallel>], iteration_bounds = array<i64: 2>, scalar_prefetch = 1 : i64, scratch_operands = 0 : i64, tpu.core_type = #tpu.core_type<tc>, window_params = [{transform_indices = @transform_0, window_bounds = array<i64: 2, 512>}, {transform_indices = @transform_1, window_bounds = array<i64: 2, 15, 512>}]} {
    %c0 = arith.constant 0 : index
    %c0_0 = arith.constant 0 : index
    %0 = vector.load %arg2[%c0, %c0_0] : memref<2x512xf32, #tpu.memory_space<vmem>>, vector<2x512xf32>
    %cst = arith.constant 0.000000e+00 : f32
    %cst_1 = arith.constant 1.000000e+00 : f32
    %1 = vector.broadcast %cst : f32 to vector<2x512xf32>
    %2 = arith.maximumf %1, %0 : vector<2x512xf32>
    %3 = vector.broadcast %cst_1 : f32 to vector<2x512xf32>
    %4 = arith.minimumf %3, %2 : vector<2x512xf32>
    %cst_2 = arith.constant 0x4B000000 : f32
    %5 = vector.broadcast %cst_2 : f32 to vector<2x512xf32>
    %6 = arith.mulf %4, %5 : vector<2x512xf32>
    %7 = arith.fptosi %6 : vector<2x512xf32> to vector<2x512xi32>
    %8 = vector.shape_cast %7 : vector<2x512xi32> to vector<2x1x512xi32>
    %c0_3 = arith.constant 0 : index
    %9 = memref.load %arg1[%c0_3] : memref<1xi32, #tpu.memory_space<smem>>
    %10 = tpu.iota {dimensions = array<i32: 0>} : vector<2x1x512xi32>
    %11 = tpu.iota {dimensions = array<i32: 2>} : vector<2x1x512xi32>
    %c512_i32 = arith.constant 512 : i32
    %12 = arith.muli %c512_i32, %arg0 : i32
    %13 = vector.broadcast %12 : i32 to vector<2x1x512xi32>
    %14 = arith.addi %11, %13 : vector<2x1x512xi32>
    %c1024_i32 = arith.constant 1024 : i32
    %15 = vector.broadcast %c1024_i32 : i32 to vector<2x1x512xi32>
    %16 = arith.muli %10, %15 : vector<2x1x512xi32>
    %17 = arith.addi %16, %14 : vector<2x1x512xi32>
    %c-2048144789_i32 = arith.constant -2048144789 : i32
    %18 = arith.muli %9, %c-2048144789_i32 : i32
    %19 = vector.broadcast %18 : i32 to vector<2x1x512xi32>
    %20 = arith.addi %17, %19 : vector<2x1x512xi32>
    %21 = tpu.iota {dimensions = array<i32: 1>} : vector<1x8x1xi32>
    %c1_i32 = arith.constant 1 : i32
    %22 = vector.broadcast %c1_i32 : i32 to vector<1x8x1xi32>
    %23 = arith.addi %21, %22 : vector<1x8x1xi32>
    %c-1640531527_i32 = arith.constant -1640531527 : i32
    %24 = vector.broadcast %c-1640531527_i32 : i32 to vector<1x8x1xi32>
    %25 = arith.muli %23, %24 : vector<1x8x1xi32>
    %26 = vector.broadcast %20 : vector<2x1x512xi32> to vector<2x8x512xi32>
    %27 = vector.broadcast %25 : vector<1x8x1xi32> to vector<2x8x512xi32>
    %28 = arith.addi %26, %27 : vector<2x8x512xi32>
    %c16_i32 = arith.constant 16 : i32
    %29 = vector.broadcast %c16_i32 : i32 to vector<2x8x512xi32>
    %30 = arith.shrui %28, %29 : vector<2x8x512xi32>
    %31 = arith.xori %28, %30 : vector<2x8x512xi32>
    %c2146121005_i32 = arith.constant 2146121005 : i32
    %32 = vector.broadcast %c2146121005_i32 : i32 to vector<2x8x512xi32>
    %33 = arith.muli %31, %32 : vector<2x8x512xi32>
    %c15_i32 = arith.constant 15 : i32
    %34 = vector.broadcast %c15_i32 : i32 to vector<2x8x512xi32>
    %35 = arith.shrui %33, %34 : vector<2x8x512xi32>
    %36 = arith.xori %33, %35 : vector<2x8x512xi32>
    %c-2073254261_i32 = arith.constant -2073254261 : i32
    %37 = vector.broadcast %c-2073254261_i32 : i32 to vector<2x8x512xi32>
    %38 = arith.muli %36, %37 : vector<2x8x512xi32>
    %c16_i32_4 = arith.constant 16 : i32
    %39 = vector.broadcast %c16_i32_4 : i32 to vector<2x8x512xi32>
    %40 = arith.shrui %38, %39 : vector<2x8x512xi32>
    %41 = arith.xori %38, %40 : vector<2x8x512xi32>
    %c9_i32 = arith.constant 9 : i32
    %42 = vector.broadcast %c9_i32 : i32 to vector<2x8x512xi32>
    %43 = arith.shrui %41, %42 : vector<2x8x512xi32>
    %44 = vector.broadcast %8 : vector<2x1x512xi32> to vector<2x8x512xi32>
    %45 = arith.cmpi slt, %43, %44 : vector<2x8x512xi32>
    %46 = arith.extui %45 : vector<2x8x512xi1> to vector<2x8x512xi32>
    %47 = arith.sitofp %46 : vector<2x8x512xi32> to vector<2x8x512xf32>
    %c0_5 = arith.constant 0 : index
    %c0_6 = arith.constant 0 : index
    %c0_7 = arith.constant 0 : index
    %48 = vector.load %arg3[%c0_5, %c0_6, %c0_7] : memref<2x15x512xf32, #tpu.memory_space<vmem>>, vector<2x8x512xf32>
    tpu.vector_store %arg3[%c0_5, %c0_6, %c0_7], %47 {strides = array<i32>} : memref<2x15x512xf32, #tpu.memory_space<vmem>>, vector<2x8x512xf32>,
    %49 = tpu.iota {dimensions = array<i32: 1>} : vector<1x8x1xi32>
    %c9_i32_8 = arith.constant 9 : i32
    %50 = vector.broadcast %c9_i32_8 : i32 to vector<1x8x1xi32>
    %51 = arith.addi %49, %50 : vector<1x8x1xi32>
    %c-1640531527_i32_9 = arith.constant -1640531527 : i32
    %52 = vector.broadcast %c-1640531527_i32_9 : i32 to vector<1x8x1xi32>
    %53 = arith.muli %51, %52 : vector<1x8x1xi32>
    %54 = vector.broadcast %20 : vector<2x1x512xi32> to vector<2x8x512xi32>
    %55 = vector.broadcast %53 : vector<1x8x1xi32> to vector<2x8x512xi32>
    %56 = arith.addi %54, %55 : vector<2x8x512xi32>
    %c16_i32_10 = arith.constant 16 : i32
    %57 = vector.broadcast %c16_i32_10 : i32 to vector<2x8x512xi32>
    %58 = arith.shrui %56, %57 : vector<2x8x512xi32>
    %59 = arith.xori %56, %58 : vector<2x8x512xi32>
    %c2146121005_i32_11 = arith.constant 2146121005 : i32
    %60 = vector.broadcast %c2146121005_i32_11 : i32 to vector<2x8x512xi32>
    %61 = arith.muli %59, %60 : vector<2x8x512xi32>
    %c15_i32_12 = arith.constant 15 : i32
    %62 = vector.broadcast %c15_i32_12 : i32 to vector<2x8x512xi32>
    %63 = arith.shrui %61, %62 : vector<2x8x512xi32>
    %64 = arith.xori %61, %63 : vector<2x8x512xi32>
    %c-2073254261_i32_13 = arith.constant -2073254261 : i32
    %65 = vector.broadcast %c-2073254261_i32_13 : i32 to vector<2x8x512xi32>
    %66 = arith.muli %64, %65 : vector<2x8x512xi32>
    %c16_i32_14 = arith.constant 16 : i32
    %67 = vector.broadcast %c16_i32_14 : i32 to vector<2x8x512xi32>
    %68 = arith.shrui %66, %67 : vector<2x8x512xi32>
    %69 = arith.xori %66, %68 : vector<2x8x512xi32>
    %c9_i32_15 = arith.constant 9 : i32
    %70 = vector.broadcast %c9_i32_15 : i32 to vector<2x8x512xi32>
    %71 = arith.shrui %69, %70 : vector<2x8x512xi32>
    %72 = vector.broadcast %8 : vector<2x1x512xi32> to vector<2x8x512xi32>
    %73 = arith.cmpi slt, %71, %72 : vector<2x8x512xi32>
    %74 = arith.extui %73 : vector<2x8x512xi1> to vector<2x8x512xi32>
    %75 = arith.sitofp %74 : vector<2x8x512xi32> to vector<2x8x512xf32>
    %76 = vector.extract_strided_slice %75 {offsets = [0, 0, 0], sizes = [2, 7, 512], strides = [1, 1, 1]} : vector<2x8x512xf32> to vector<2x7x512xf32>
    %c0_16 = arith.constant 0 : index
    %c8 = arith.constant 8 : index
    %c0_17 = arith.constant 0 : index
    %77 = vector.load %arg3[%c0_16, %c8, %c0_17] : memref<2x15x512xf32, #tpu.memory_space<vmem>>, vector<2x7x512xf32>
    tpu.vector_store %arg3[%c0_16, %c8, %c0_17], %76 {strides = array<i32>} : memref<2x15x512xf32, #tpu.memory_space<vmem>>, vector<2x7x512xf32>,
    return
  }
  func.func @transform_0(%arg0: i32, %arg1: memref<1xi32, #tpu.memory_space<smem>>) -> (i32, i32) {
    %c0_i32 = arith.constant 0 : i32
    %c0_i32_0 = arith.constant 0 : i32
    return %c0_i32, %arg0 : i32, i32
  }
  func.func @transform_1(%arg0: i32, %arg1: memref<1xi32, #tpu.memory_space<smem>>) -> (i32, i32, i32) {
    %c0_i32 = arith.constant 0 : i32
    %c0_i32_0 = arith.constant 0 : i32
    %c0_i32_1 = arith.constant 0 : i32
    return %c0_i32, %c0_i32_0, %arg0 : i32, i32, i32
  }
}

</mosaic_0001>

<llo_original>
// kernel: tpu_custom_call.1
$region0: #{tpu_custom_call.1}
  #allocation0 [shape = 'u32[]', space=smem, size = 0x4, offset = 0x4, fixed_abs, tag = 'smem constant byte address 0x4 - core index']
  #allocation1 [shape = 'u32[144,128]{1,0:T(1,128)}', space=vmem, size = 0x12000, scoped, tag = 'internal scratch']
  #allocation2 [shape = 's32[1]{0}', space=sflag, size = 0x4, scoped, tag = 'scoped memory for tpu_custom_call.1']
  #allocation3 [shape = 's32[1]{0:T(128)S(6)}', space=smem, size = 0x200, scoped, tag = 'prefetched SMEM operand 0']
  %s0 = inlined_call_operand.<no memory space> [shape: s32[1], index: 0, kind: input, shape index: {}]
  %s1 = inlined_call_operand.hbm [shape: f32[2,1024], index: 1, kind: input, shape index: {}]
  %s2 = inlined_call_operand.vmem [shape: f32[2,15,1024], index: 2, kind: output, shape index: {}]
  %s3 = sld [smem:[#allocation0]]
  $region60: #{tpu_custom_call.1} parent=0
    _
  %s5 = ssub.s32 1, %s3
  %s6 = scalar_select 0, %s5, %s3
  %7 = sst [smem:[#allocation3]] %s0
  $region1: #{tpu_custom_call.1} parent=0
    #allocation4 [shape = 'u8[8192]{0}', space=vmem, size = 0x2000, scoped, tag = 'input window, operand 1']
    #allocation5 [shape = 's32[2]{0}', space=sflag, size = 0x8, scoped, tag = 'scoped memory for tpu_custom_call.1']
    #allocation6 [shape = 'u8[131072]{0}', space=vmem, size = 0x20000, scoped, tag = 'output window, operand 0']
    %8 = vsyncpa [#allocation5], 0
    %s9 = scalar_lea.sflag [#allocation5], 1
    %10 = vsyncpa %s9, 0
    loop: start=0, step=1, limit=4
    $region2: #{tpu_custom_call.1} parent=1 // loop_pre_header
      _
    $region3: #{tpu_custom_call.1} parent=1 // loop_header
      %s12 = sphi 0, %s16
      %p13 = scmp.ge.s32.totalorder %s12, 4
      %s22 = sphi 0, %s24
      %s25 = sphi 0, %s22
      %s26 = sphi 0, %s25
      %s42 = sphi 0, %s26
      %s48 = sphi 0, %s50
      %s51 = sphi 0, %s48
      %s52 = sphi 0, %s51
      %s68 = sphi 0, %s52
    $region4: #{tpu_custom_call.1} parent=1 // loop_header_branch
      %15 = sbr.rel (%p13) target = $region8
    $region5: #{tpu_custom_call.1} parent=1 // loop_body
      %s17 = ssub.s32 %s12, 1
      %s18 = ssub.s32 %s12, 2
      %s19 = sadd.s32 %s12, 1
      %s20 = ssub.s32 %s12, %s19
      %p21 = scmp.eq.s32.totalorder %s20, 0
      %s23 = sadd.s32 %s22, 1
      %s24 = scalar_select %p21, %s22, %s23
      %p27 = pneg %p21
      %p28 = scmp.eq.s32.totalorder %s12, 1
      %p29 = por %p27, %p28
      %p30 = scmp.ne.s32.totalorder %s22, %s25
      %p31 = scmp.eq.s32.totalorder %s12, 0
      %p32 = por %p30, %p31
      %p33 = scmp.ne.s32.totalorder %s22, %s25
      %p34 = scmp.eq.s32.totalorder %s17, 1
      %p35 = por %p33, %p34
      %p36 = scmp.ne.s32.totalorder %s25, %s26
      %p37 = scmp.eq.s32.totalorder %s17, 0
      %p38 = por %p36, %p37
      %p39 = scmp.ne.s32.totalorder %s25, %s26
      %p40 = scmp.eq.s32.totalorder %s18, 1
      %p41 = por %p39, %p40
      %p43 = scmp.ne.s32.totalorder %s26, %s42
      %p44 = scmp.eq.s32.totalorder %s18, 0
      %p45 = por %p43, %p44
      %s46 = ssub.s32 %s12, %s19
      %p47 = scmp.eq.s32.totalorder %s46, 0
      %s49 = sadd.s32 %s48, 1
      %s50 = scalar_select %p47, %s48, %s49
      %p53 = pneg %p47
      %p54 = scmp.eq.s32.totalorder %s12, 1
      %p55 = por %p53, %p54
      %p56 = scmp.ne.s32.totalorder %s48, %s51
      %p57 = scmp.eq.s32.totalorder %s12, 0
      %p58 = por %p56, %p57
      %p59 = scmp.ne.s32.totalorder %s48, %s51
      %p60 = scmp.eq.s32.totalorder %s17, 1
      %p61 = por %p59, %p60
      %p62 = scmp.ne.s32.totalorder %s51, %s52
      %p63 = scmp.eq.s32.totalorder %s17, 0
      %p64 = por %p62, %p63
      %p65 = scmp.ne.s32.totalorder %s51, %s52
      %p66 = scmp.eq.s32.totalorder %s18, 1
      %p67 = por %p65, %p66
      %p69 = scmp.ne.s32.totalorder %s52, %s68
      %p70 = scmp.eq.s32.totalorder %s18, 0
      %p71 = por %p69, %p70
      %p72 = scmp.le.s32.totalorder 1, %s12
      %p73 = scmp.lt.s32.totalorder %s12, 3
      %p74 = pnand %p72, %p73
      %p75 = pneg %p74
      // Predicated region
      $region9: #{tpu_custom_call.1} parent=5 // pred_check
        _
      $region10: #{tpu_custom_call.1} parent=5 // pred_check_branch
        %77 = sbr.rel (%p74) target = $region12
      $region11: #{tpu_custom_call.1} parent=5 // pred_region
        %s78 = ssub.s32 %s12, 1
      $region12: #{tpu_custom_call.1} parent=5 // pred_fallthru
        _
      %p79 = scmp.lt.s32.totalorder %s12, 2
      // Predicated region
      $region13: #{tpu_custom_call.1} parent=5 // pred_check
        %p80 = pneg %p79
      $region14: #{tpu_custom_call.1} parent=5 // pred_check_branch
        %82 = sbr.rel (%p80) target = $region16
      $region15: #{tpu_custom_call.1} parent=5 // pred_region
        // Predicated region
        $region17: #{tpu_custom_call.1} parent=15 // pred_check
          %p83 = pneg %p32
        $region18: #{tpu_custom_call.1} parent=15 // pred_check_branch
          %85 = sbr.rel (%p83) target = $region20
        $region19: #{tpu_custom_call.1} parent=15 // pred_region
          %s86 = sand.u32 %s22, 1
          %s87 = scalar_lea.sflag [#allocation5], %s86
          %s88 = sand.u32 %s22, 1
          %s89 = smul.addr %s88, 8
          %s90 = scalar_lea.vmem [#allocation4], %s89
          %s91 = smul.u32 4, %s12
          %s93 = ssub.s32 128, 128
          %94 = vsyncadd %s87, %s93
          %s95 = smul.addr %s91, 32
          %s96 = scalar_lea.hbm %s1, %s95
          %s98 = sshll.u32 %s90, 4
          %s99 = int_to_ptr.vmem [resolvable:$true] %s98
          %101 = dma.hbm_to_vmem [thread:$0]  %s96, 128, %s99, %s87
        $region20: #{tpu_custom_call.1} parent=15 // pred_fallthru
          _
      $region16: #{tpu_custom_call.1} parent=5 // pred_fallthru
        _
      %p102 = scmp.le.s32.totalorder 1, %s12
      %p103 = scmp.lt.s32.totalorder %s12, 3
      %p104 = pnand %p102, %p103
      %p105 = pneg %p104
      // Predicated region
      $region21: #{tpu_custom_call.1} parent=5 // pred_check
        _
      $region22: #{tpu_custom_call.1} parent=5 // pred_check_branch
        %107 = sbr.rel (%p104) target = $region24
      $region23: #{tpu_custom_call.1} parent=5 // pred_region
        %s108 = ssub.s32 %s12, 1
        %s109 = sand.u32 %s25, 1
        %s110 = scalar_lea.sflag [#allocation5], %s109
        %s111 = sand.u32 %s25, 1
        %s112 = smul.addr %s111, 8
        %s113 = scalar_lea.vmem [#allocation4], %s112
        // Predicated region
        $region25: #{tpu_custom_call.1} parent=23 // pred_check
          %p114 = pneg %p38
        $region26: #{tpu_custom_call.1} parent=23 // pred_check_branch
          %116 = sbr.rel (%p114) target = $region28
        $region27: #{tpu_custom_call.1} parent=23 // pred_region
          %117 = dma.done %s110, 128
        $region28: #{tpu_custom_call.1} parent=23 // pred_fallthru
          _
        %s118 = sand.u32 %s25, 1
        %s119 = scalar_lea.sflag [#allocation5], %s118
        %s120 = sand.u32 %s25, 1
        %s121 = smul.addr %s120, 8
        %s122 = scalar_lea.vmem [#allocation4], %s121
        %p123 = pneg %p38
        %p124 = pneg %p35
        %p125 = pneg %p64
        %p126 = pneg %p61
        %s127 = sand.u32 %s51, 1
        %s128 = sand.u32 %s51, 1
        %s129 = smul.addr %s128, 128
        %s130 = scalar_lea.vmem [#allocation6], %s129
        %s131 = smul.u32 4, %s17
        %s132 = smul.u32 4, %s17
        %v133 = vld [vmem:[%s113] sm:$0xff]
        %v134 = vmax.f32 %v133, 0.0
        %v135 = vmin.f32 %v134, 1.0
        %v136 = vmul.f32 %v135, 8388608.0
        %v137 = vcvt.f32.s32.to.zero.pseudo %v136
        %v139 = vunpack.c.l.s4 1966171168
        %v140 = vunpack.c.0.s8 %v139
        %v141 = vlaneseq
        %v142 = vshrl.u32 %v141, 7
        %v143 = vsub.s32 %v140, %v142
        %v144 = vrot.slane %v137, %v143
        %v145 = vcombine.high %v144, %v144
        %s146 = sld [smem:[#allocation3]]
        %v147 = vlaneseq
        %v148 = vand.u32 %v147, 127
        %v149 = vadd.s32 %v148, 128
        %v150 = vadd.s32 %v148, 256
        %v151 = vadd.s32 %v148, 384
        %s152 = smul.u32 %s17, 512
        %v153 = vstv %s152
        %v154 = vadd.s32 %v148, %v153
        %v155 = vadd.s32 %v149, %v153
        %v156 = vadd.s32 %v150, %v153
        %v157 = vadd.s32 %v151, %v153
        %v158 = vadd.s32 %v154, 1024
        %v159 = vadd.s32 %v155, 1024
        %v160 = vadd.s32 %v156, 1024
        %v161 = vadd.s32 %v157, 1024
        %s162 = smul.u32 %s146, 2246822507
        %v163 = vstv %s162
        %v164 = vadd.s32 %v154, %v163
        %v165 = vadd.s32 %v155, %v163
        %v166 = vadd.s32 %v156, %v163
        %v167 = vadd.s32 %v157, %v163
        %v168 = vadd.s32 %v158, %v163
        %v169 = vadd.s32 %v159, %v163
        %v170 = vadd.s32 %v160, %v163
        %v171 = vadd.s32 %v161, %v163
        %v172 = vlaneseq
        %v173 = vshrl.u32 %v172, 7
        %v174 = vadd.s32 %v173, 1
        %v175 = vmul.u32 %v174, 2654435769
        %v176 = vadd.s32 %v164, %v175
        %v177 = vadd.s32 %v165, %v175
        %v178 = vadd.s32 %v166, %v175
        %v179 = vadd.s32 %v167, %v175
        %v180 = vadd.s32 %v168, %v175
        %v181 = vadd.s32 %v169, %v175
        %v182 = vadd.s32 %v170, %v175
        %v183 = vadd.s32 %v171, %v175
        %v184 = vshrl.u32 %v176, 16
        %v185 = vshrl.u32 %v177, 16
        %v186 = vshrl.u32 %v178, 16
        %v187 = vshrl.u32 %v179, 16
        %v188 = vshrl.u32 %v180, 16
        %v189 = vshrl.u32 %v181, 16
        %v190 = vshrl.u32 %v182, 16
        %v191 = vshrl.u32 %v183, 16
        %v192 = vxor.u32 %v176, %v184
        %v193 = vxor.u32 %v177, %v185
        %v194 = vxor.u32 %v178, %v186
        %v195 = vxor.u32 %v179, %v187
        %v196 = vxor.u32 %v180, %v188
        %v197 = vxor.u32 %v181, %v189
        %v198 = vxor.u32 %v182, %v190
        %v199 = vxor.u32 %v183, %v191
        %v200 = vmul.u32 %v192, 2146121005
        %v201 = vmul.u32 %v193, 2146121005
        %v202 = vmul.u32 %v194, 2146121005
        %v203 = vmul.u32 %v195, 2146121005
        %v204 = vmul.u32 %v196, 2146121005
        %v205 = vmul.u32 %v197, 2146121005
        %v206 = vmul.u32 %v198, 2146121005
        %v207 = vmul.u32 %v199, 2146121005
        %v208 = vshrl.u32 %v200, 15
        %v209 = vshrl.u32 %v201, 15
        %v210 = vshrl.u32 %v202, 15
        %v211 = vshrl.u32 %v203, 15
        %v212 = vshrl.u32 %v204, 15
        %v213 = vshrl.u32 %v205, 15
        %v214 = vshrl.u32 %v206, 15
        %v215 = vshrl.u32 %v207, 15
        %v216 = vxor.u32 %v200, %v208
        %v217 = vxor.u32 %v201, %v209
        %v218 = vxor.u32 %v202, %v210
        %v219 = vxor.u32 %v203, %v211
        %v220 = vxor.u32 %v204, %v212
        %v221 = vxor.u32 %v205, %v213
        %v222 = vxor.u32 %v206, %v214
        %v223 = vxor.u32 %v207, %v215
        %v224 = vmul.u32 %v216, 2221713035
        %v225 = vmul.u32 %v217, 2221713035
        %v226 = vmul.u32 %v218, 2221713035
        %v227 = vmul.u32 %v219, 2221713035
        %v228 = vmul.u32 %v220, 2221713035
        %v229 = vmul.u32 %v221, 2221713035
        %v230 = vmul.u32 %v222, 2221713035
        %v231 = vmul.u32 %v223, 2221713035
        %v232 = vshrl.u32 %v224, 16
        %v233 = vshrl.u32 %v225, 16
        %v234 = vshrl.u32 %v226, 16
        %v235 = vshrl.u32 %v227, 16
        %v236 = vshrl.u32 %v228, 16
        %v237 = vshrl.u32 %v229, 16
        %v238 = vshrl.u32 %v230, 16
        %v239 = vshrl.u32 %v231, 16
        %v240 = vxor.u32 %v224, %v232
        %v241 = vxor.u32 %v225, %v233
        %v242 = vxor.u32 %v226, %v234
        %v243 = vxor.u32 %v227, %v235
        %v244 = vxor.u32 %v228, %v236
        %v245 = vxor.u32 %v229, %v237
        %v246 = vxor.u32 %v230, %v238
        %v247 = vxor.u32 %v231, %v239
        %v248 = vshrl.u32 %v240, 9
        %v249 = vshrl.u32 %v241, 9
        %v250 = vshrl.u32 %v242, 9
        %v251 = vshrl.u32 %v243, 9
        %v252 = vshrl.u32 %v244, 9
        %v253 = vshrl.u32 %v245, 9
        %v254 = vshrl.u32 %v246, 9
        %v255 = vshrl.u32 %v247, 9
        %v256 = vlaneseq
        %v257 = vshrl.u32 %v256, 7
        %v258 = vsub.s32 0, %v257
        %v259 = vrot.slane %v144, %v258
        %v260 = vlaneseq
        %v261 = vshrl.u32 %v260, 7
        %v262 = vsub.s32 1, %v261
        %v263 = vrot.slane %v144, %v262
        %v264 = vlaneseq
        %v265 = vshrl.u32 %v264, 7
        %v266 = vsub.s32 2, %v265
        %v267 = vrot.slane %v144, %v266
        %v268 = vlaneseq
        %v269 = vshrl.u32 %v268, 7
        %v270 = vsub.s32 3, %v269
        %v271 = vrot.slane %v144, %v270
        %v272 = vlaneseq
        %v273 = vshrl.u32 %v272, 7
        %v274 = vsub.s32 0, %v273
        %v275 = vrot.slane %v145, %v274
        %v276 = vlaneseq
        %v277 = vshrl.u32 %v276, 7
        %v278 = vsub.s32 1, %v277
        %v279 = vrot.slane %v145, %v278
        %v280 = vlaneseq
        %v281 = vshrl.u32 %v280, 7
        %v282 = vsub.s32 2, %v281
        %v283 = vrot.slane %v145, %v282
        %v284 = vlaneseq
        %v285 = vshrl.u32 %v284, 7
        %v286 = vsub.s32 3, %v285
        %v287 = vrot.slane %v145, %v286
        %vm288 = vcmp.lt.s32.totalorder %v248, %v259
        %vm289 = vcmp.lt.s32.totalorder %v249, %v263
        %vm290 = vcmp.lt.s32.totalorder %v250, %v267
        %vm291 = vcmp.lt.s32.totalorder %v251, %v271
        %vm292 = vcmp.lt.s32.totalorder %v252, %v275
        %vm293 = vcmp.lt.s32.totalorder %v253, %v279
        %vm294 = vcmp.lt.s32.totalorder %v254, %v283
        %vm295 = vcmp.lt.s32.totalorder %v255, %v287
        %v296 = vsel %vm288, 1, 0
        %v297 = vsel %vm289, 1, 0
        %v298 = vsel %vm290, 1, 0
        %v299 = vsel %vm291, 1, 0
        %v300 = vsel %vm292, 1, 0
        %v301 = vsel %vm293, 1, 0
        %v302 = vsel %vm294, 1, 0
        %v303 = vsel %vm295, 1, 0
        %v304 = vcvt.s32.f32 %v296
        %v305 = vcvt.s32.f32 %v297
        %v306 = vcvt.s32.f32 %v298
        %v307 = vcvt.s32.f32 %v299
        %v308 = vcvt.s32.f32 %v300
        %v309 = vcvt.s32.f32 %v301
        %v310 = vcvt.s32.f32 %v302
        %v311 = vcvt.s32.f32 %v303
        %312 = vst [vmem:[%s130] sm:$0xff] %v304
        %313 = vst [vmem:[%s130 + $0x8] sm:$0xff] %v305
        %314 = vst [vmem:[%s130 + $0x10] sm:$0xff] %v306
        %315 = vst [vmem:[%s130 + $0x18] sm:$0xff] %v307
        %316 = vst [vmem:[%s130 + $0x40] sm:$0xff] %v308
        %317 = vst [vmem:[%s130 + $0x48] sm:$0xff] %v309
        %318 = vst [vmem:[%s130 + $0x50] sm:$0xff] %v310
        %319 = vst [vmem:[%s130 + $0x58] sm:$0xff] %v311
        %v320 = vadd.s32 %v173, 9
        %v321 = vmul.u32 %v320, 2654435769
        %v322 = vadd.s32 %v164, %v321
        %v323 = vadd.s32 %v165, %v321
        %v324 = vadd.s32 %v166, %v321
        %v325 = vadd.s32 %v167, %v321
        %v326 = vadd.s32 %v168, %v321
        %v327 = vadd.s32 %v169, %v321
        %v328 = vadd.s32 %v170, %v321
        %v329 = vadd.s32 %v171, %v321
        %v330 = vshrl.u32 %v322, 16
        %v331 = vshrl.u32 %v323, 16
        %v332 = vshrl.u32 %v324, 16
        %v333 = vshrl.u32 %v325, 16
        %v334 = vshrl.u32 %v326, 16
        %v335 = vshrl.u32 %v327, 16
        %v336 = vshrl.u32 %v328, 16
        %v337 = vshrl.u32 %v329, 16
        %v338 = vxor.u32 %v322, %v330
        %v339 = vxor.u32 %v323, %v331
        %v340 = vxor.u32 %v324, %v332
        %v341 = vxor.u32 %v325, %v333
        %v342 = vxor.u32 %v326, %v334
        %v343 = vxor.u32 %v327, %v335
        %v344 = vxor.u32 %v328, %v336
        %v345 = vxor.u32 %v329, %v337
        %v346 = vmul.u32 %v338, 2146121005
        %v347 = vmul.u32 %v339, 2146121005
        %v348 = vmul.u32 %v340, 2146121005
        %v349 = vmul.u32 %v341, 2146121005
        %v350 = vmul.u32 %v342, 2146121005
        %v351 = vmul.u32 %v343, 2146121005
        %v352 = vmul.u32 %v344, 2146121005
        %v353 = vmul.u32 %v345, 2146121005
        %v354 = vshrl.u32 %v346, 15
        %v355 = vshrl.u32 %v347, 15
        %v356 = vshrl.u32 %v348, 15
        %v357 = vshrl.u32 %v349, 15
        %v358 = vshrl.u32 %v350, 15
        %v359 = vshrl.u32 %v351, 15
        %v360 = vshrl.u32 %v352, 15
        %v361 = vshrl.u32 %v353, 15
        %v362 = vxor.u32 %v346, %v354
        %v363 = vxor.u32 %v347, %v355
        %v364 = vxor.u32 %v348, %v356
        %v365 = vxor.u32 %v349, %v357
        %v366 = vxor.u32 %v350, %v358
        %v367 = vxor.u32 %v351, %v359
        %v368 = vxor.u32 %v352, %v360
        %v369 = vxor.u32 %v353, %v361
        %v370 = vmul.u32 %v362, 2221713035
        %v371 = vmul.u32 %v363, 2221713035
        %v372 = vmul.u32 %v364, 2221713035
        %v373 = vmul.u32 %v365, 2221713035
        %v374 = vmul.u32 %v366, 2221713035
        %v375 = vmul.u32 %v367, 2221713035
        %v376 = vmul.u32 %v368, 2221713035
        %v377 = vmul.u32 %v369, 2221713035
        %v378 = vshrl.u32 %v370, 16
        %v379 = vshrl.u32 %v371, 16
        %v380 = vshrl.u32 %v372, 16
        %v381 = vshrl.u32 %v373, 16
        %v382 = vshrl.u32 %v374, 16
        %v383 = vshrl.u32 %v375, 16
        %v384 = vshrl.u32 %v376, 16
        %v385 = vshrl.u32 %v377, 16
        %v386 = vxor.u32 %v370, %v378
        %v387 = vxor.u32 %v371, %v379
        %v388 = vxor.u32 %v372, %v380
        %v389 = vxor.u32 %v373, %v381
        %v390 = vxor.u32 %v374, %v382
        %v391 = vxor.u32 %v375, %v383
        %v392 = vxor.u32 %v376, %v384
        %v393 = vxor.u32 %v377, %v385
        %v394 = vshrl.u32 %v386, 9
        %v395 = vshrl.u32 %v387, 9
        %v396 = vshrl.u32 %v388, 9
        %v397 = vshrl.u32 %v389, 9
        %v398 = vshrl.u32 %v390, 9
        %v399 = vshrl.u32 %v391, 9
        %v400 = vshrl.u32 %v392, 9
        %v401 = vshrl.u32 %v393, 9
        %vm402 = vcmp.lt.s32.totalorder %v394, %v259
        %vm403 = vcmp.lt.s32.totalorder %v395, %v263
        %vm404 = vcmp.lt.s32.totalorder %v396, %v267
        %vm405 = vcmp.lt.s32.totalorder %v397, %v271
        %vm406 = vcmp.lt.s32.totalorder %v398, %v275
        %vm407 = vcmp.lt.s32.totalorder %v399, %v279
        %vm408 = vcmp.lt.s32.totalorder %v400, %v283
        %vm409 = vcmp.lt.s32.totalorder %v401, %v287
        %v410 = vsel %vm402, 1, 0
        %v411 = vsel %vm403, 1, 0
        %v412 = vsel %vm404, 1, 0
        %v413 = vsel %vm405, 1, 0
        %v414 = vsel %vm406, 1, 0
        %v415 = vsel %vm407, 1, 0
        %v416 = vsel %vm408, 1, 0
        %v417 = vsel %vm409, 1, 0
        %v418 = vcvt.s32.f32 %v410
        %v419 = vcvt.s32.f32 %v411
        %v420 = vcvt.s32.f32 %v412
        %v421 = vcvt.s32.f32 %v413
        %v422 = vcvt.s32.f32 %v414
        %v423 = vcvt.s32.f32 %v415
        %v424 = vcvt.s32.f32 %v416
        %v425 = vcvt.s32.f32 %v417
        %426 = vst [vmem:[%s130 + $0x20] sm:$0x7f] %v418
        %427 = vst [vmem:[%s130 + $0x28] sm:$0x7f] %v419
        %428 = vst [vmem:[%s130 + $0x30] sm:$0x7f] %v420
        %429 = vst [vmem:[%s130 + $0x38] sm:$0x7f] %v421
        %430 = vst [vmem:[%s130 + $0x60] sm:$0x7f] %v422
        %431 = vst [vmem:[%s130 + $0x68] sm:$0x7f] %v423
        %432 = vst [vmem:[%s130 + $0x70] sm:$0x7f] %v424
        %433 = vst [vmem:[%s130 + $0x78] sm:$0x7f] %v425
        %s434 = sand.u32 %s51, 1
        %s435 = sand.u32 %s51, 1
        %s436 = smul.addr %s435, 128
        %s437 = scalar_lea.vmem [#allocation6], %s436
        // Predicated region
        $region29: #{tpu_custom_call.1} parent=23 // pred_check
          %p438 = pneg %p61
        $region30: #{tpu_custom_call.1} parent=23 // pred_check_branch
          %440 = sbr.rel (%p438) target = $region32
        $region31: #{tpu_custom_call.1} parent=23 // pred_region
          %s441 = smul.u32 4, %s17
          %s442 = smul.addr %s441, 8
          %s443 = scalar_lea.vmem %s2, %s442
          // Predicated region
          $region33: #{tpu_custom_call.1} parent=31 // pred_check
            _
          $region34: #{tpu_custom_call.1} parent=31 // pred_check_branch
            %445 = sbr.rel (0) target = $region36
          $region35: #{tpu_custom_call.1} parent=31 // pred_region
            // Predicated region
            $region37: #{tpu_custom_call.1} parent=35 // pred_check
              _
            $region38: #{tpu_custom_call.1} parent=35 // pred_check_branch
              %447 = sbr.rel (0) target = $region40
            $region39: #{tpu_custom_call.1} parent=35 // pred_region
              loop: start=0, step=1, limit=1
              $region41: #{tpu_custom_call.1} parent=39 // loop_pre_header
                _
              $region42: #{tpu_custom_call.1} parent=39 // loop_header
                %s449 = sphi 0, %s453
                %p450 = scmp.ge.s32.totalorder %s449, 1
                %s454 = sphi %s437, %s437
                %s455 = sphi %s443, %s443
              $region43: #{tpu_custom_call.1} parent=39 // loop_header_branch
                %452 = sbr.rel (%p450) target = $region47
              $region44: #{tpu_custom_call.1} parent=39 // loop_body
                %v456 = vld [vmem:[%s454] sm:$0xff]
                %457 = vst [vmem:[%s455] sm:$0xff] %v456
                %v458 = vld [vmem:[%s454 + $0x8] sm:$0xff]
                %459 = vst [vmem:[%s455 + $0x8] sm:$0xff] %v458
                %v460 = vld [vmem:[%s454 + $0x10] sm:$0xff]
                %461 = vst [vmem:[%s455 + $0x10] sm:$0xff] %v460
                %v462 = vld [vmem:[%s454 + $0x18] sm:$0xff]
                %463 = vst [vmem:[%s455 + $0x18] sm:$0xff] %v462
                %v464 = vld [vmem:[%s454 + $0x20] sm:$0xff]
                %465 = vst [vmem:[%s455 + $0x40] sm:$0xff] %v464
                %v466 = vld [vmem:[%s454 + $0x28] sm:$0xff]
                %467 = vst [vmem:[%s455 + $0x48] sm:$0xff] %v466
                %v468 = vld [vmem:[%s454 + $0x30] sm:$0xff]
                %469 = vst [vmem:[%s455 + $0x50] sm:$0xff] %v468
                %v470 = vld [vmem:[%s454 + $0x38] sm:$0xff]
                %471 = vst [vmem:[%s455 + $0x58] sm:$0xff] %v470
                %v472 = vld [vmem:[%s454 + $0x40] sm:$0xff]
                %473 = vst [vmem:[%s455 + $0x80] sm:$0xff] %v472
                %v474 = vld [vmem:[%s454 + $0x48] sm:$0xff]
                %475 = vst [vmem:[%s455 + $0x88] sm:$0xff] %v474
                %v476 = vld [vmem:[%s454 + $0x50] sm:$0xff]
                %477 = vst [vmem:[%s455 + $0x90] sm:$0xff] %v476
                %v478 = vld [vmem:[%s454 + $0x58] sm:$0xff]
                %479 = vst [vmem:[%s455 + $0x98] sm:$0xff] %v478
                %v480 = vld [vmem:[%s454 + $0x60] sm:$0xff]
                %481 = vst [vmem:[%s455 + $0xc0] sm:$0xff] %v480
                %v482 = vld [vmem:[%s454 + $0x68] sm:$0xff]
                %483 = vst [vmem:[%s455 + $0xc8] sm:$0xff] %v482
                %v484 = vld [vmem:[%s454 + $0x70] sm:$0xff]
                %485 = vst [vmem:[%s455 + $0xd0] sm:$0xff] %v484
                %v486 = vld [vmem:[%s454 + $0x78] sm:$0xff]
                %487 = vst [vmem:[%s455 + $0xd8] sm:$0xff] %v486
              $region45: #{tpu_custom_call.1} parent=39 // loop_footer
                %s453 = sadd.s32 1, %s449
              $region46: #{tpu_custom_call.1} parent=39 // loop_footer_branch
                %448 = sbr.rel target = $region42
              $region47: #{tpu_custom_call.1} parent=39 // loop_exit
                _
            $region40: #{tpu_custom_call.1} parent=35 // pred_fallthru
              _
            // Predicated region
            $region48: #{tpu_custom_call.1} parent=35 // pred_check
              _
            $region49: #{tpu_custom_call.1} parent=35 // pred_check_branch
              %489 = sbr.rel target = $region51
            $region50: #{tpu_custom_call.1} parent=35 // pred_region
              _
            $region51: #{tpu_custom_call.1} parent=35 // pred_fallthru
              _
          $region36: #{tpu_custom_call.1} parent=31 // pred_fallthru
            _
          %490 = vnop
        $region32: #{tpu_custom_call.1} parent=23 // pred_fallthru
          _
      $region24: #{tpu_custom_call.1} parent=5 // pred_fallthru
        _
      %p491 = scmp.le.s32.totalorder 2, %s12
      // Predicated region
      $region52: #{tpu_custom_call.1} parent=5 // pred_check
        %p492 = pneg %p491
      $region53: #{tpu_custom_call.1} parent=5 // pred_check_branch
        %494 = sbr.rel (%p492) target = $region55
      $region54: #{tpu_custom_call.1} parent=5 // pred_region
        %s495 = ssub.s32 %s12, 2
        // Predicated region
        $region56: #{tpu_custom_call.1} parent=54 // pred_check
          %p496 = pneg %p67
        $region57: #{tpu_custom_call.1} parent=54 // pred_check_branch
          %498 = sbr.rel (%p496) target = $region59
        $region58: #{tpu_custom_call.1} parent=54 // pred_region
          %s499 = sand.u32 %s52, 1
          %s500 = sand.u32 %s52, 1
          %s501 = smul.addr %s500, 128
          %s502 = scalar_lea.vmem [#allocation6], %s501
        $region59: #{tpu_custom_call.1} parent=54 // pred_fallthru
          _
      $region55: #{tpu_custom_call.1} parent=5 // pred_fallthru
        _
    $region6: #{tpu_custom_call.1} parent=1 // loop_footer
      %s16 = sadd.s32 1, %s12
    $region7: #{tpu_custom_call.1} parent=1 // loop_footer_branch
      %11 = sbr.rel target = $region3
    $region8: #{tpu_custom_call.1} parent=1 // loop_exit
      _
    %503 = vsyncpa [#allocation5], 1
    %s504 = scalar_lea.sflag [#allocation5], 1
    %505 = vsyncpa %s504, 1

</llo_original>
